<compile_context>
chip_gen: v5e
topology: v5e:2x2
jax: 0.10.0
libtpu: 0.0.40
codegen_flags: <defaults>
</compile_context>

<pallas_src>
import jax
import jax.numpy as jnp
from jax.experimental import pallas as pl
from jax.experimental.pallas import tpu as pltpu


def critic_kernel(x_ref, w1_ref, b1_ref, w2_ref, b2_ref, wv_ref, bv_ref, o_ref):
    x = x_ref[...]                                                   # [TB, H]
    # fc1 / fc2 on the MXU with f32 accumulation; bias + ReLU on the VPU.
    h = jnp.dot(x, w1_ref[...], preferred_element_type=jnp.float32)
    h = jnp.maximum(h + b1_ref[...], 0.0)
    h = jnp.dot(h.astype(w2_ref.dtype), w2_ref[...],
                preferred_element_type=jnp.float32)
    h = jnp.maximum(h + b2_ref[...], 0.0)
    # Value head off the MXU: VALU multiply + XLU row-reduction + SMEM scalar.
    v = jnp.sum(h * wv_ref[...], axis=-1) + bv_ref[0]                # [TB] f32
    # Lane-dense store: one [1, TB] row per grid step.
    o_ref[...] = v[None, :].astype(o_ref.dtype)


def _round_up(x, m):
    return ((x + m - 1) // m) * m


def _choose_batch_tiling(B, H, x_itemsize, *, stream_budget_bytes=4 << 20,
                         min_rows_per_core=2048, max_rows_per_tile=None):
    """Pick (TB, num_tiles, B_pad) minimizing padding and grid steps."""
    B8 = _round_up(B, 8)
    bytes_per_row = 2 * H * x_itemsize            # double-buffered x stream
    cap = max(8, stream_budget_bytes // bytes_per_row)
    if max_rows_per_tile is not None:
        cap = min(cap, max_rows_per_tile)
    cap = max(8, (cap // 8) * 8)
    num_tiles = pl.cdiv(B8, cap)
    # v7x megacore: split into >=2 balanced tiles only when each core still
    # gets a fat tile (otherwise per-step overhead dominates; no-op on v5e/v6e).
    if num_tiles == 1 and B8 >= 2 * min_rows_per_core:
        num_tiles = 2
    if num_tiles == 1:
        TB = B8                                   # single fat tile, 8-aligned
    else:
        TB = _round_up(pl.cdiv(B8, num_tiles), 128)   # lane-dense output rows
        num_tiles = pl.cdiv(B8, TB)
    return TB, num_tiles, TB * num_tiles


def decentralized_critic_forward(hidden, params, *, compute_dtype=jnp.bfloat16,
                                 max_rows_per_tile=None):
    """hidden: [B, H]. params: dict of weights/biases (see layout notes above)."""
    B, H = hidden.shape
    w1, b1, w2, b2, wv, bv = (
        params["w1"], params["b1"], params["w2"],
        params["b2"], params["wv"], params["bv"],
    )

    x_itemsize = jnp.dtype(compute_dtype).itemsize
    TB, num_tiles, B_pad = _choose_batch_tiling(
        B, H, x_itemsize, max_rows_per_tile=max_rows_per_tile)

    x = hidden
    if B_pad != B:
        x = jnp.pad(x, ((0, B_pad - B), (0, 0)))
    # Matmul operands in compute_dtype (bf16 -> 2x MXU throughput, half VMEM);
    # biases / value head / accumulation stay f32.
    x = x.astype(compute_dtype)
    w1c = w1.astype(compute_dtype)
    w2c = w2.astype(compute_dtype)
    b1f, b2f, wvf, bvf = (b1.astype(jnp.float32), b2.astype(jnp.float32),
                          wv.astype(jnp.float32), bv.astype(jnp.float32))

    # Advisory cost estimate: two H x H matmuls + value-head mul/add per row.
    flops = B_pad * (4 * H * H + 2 * H)
    bytes_accessed = (B_pad * H * x_itemsize + 2 * H * H * x_itemsize
                      + (3 * H + 1) * 4 + num_tiles * TB * 4)
    cost = pl.CostEstimate(flops=flops, transcendentals=0,
                           bytes_accessed=bytes_accessed)

    # Scoped-VMEM: resident weights/biases (conservatively double-buffered) +
    # streamed x / out tiles.  Only raise the limit above the smallest per-chip
    # default when needed, and cap below physical VMEM (v7x: 64 MiB per TC).
    resident_bytes = 2 * (2 * H * H * x_itemsize + 3 * H * 4)
    streamed_bytes = 2 * (TB * H * x_itemsize + TB * 4)
    vmem_need = resident_bytes + streamed_bytes + (2 << 20)
    cp_kwargs = dict(dimension_semantics=("parallel",))
    if vmem_need > (16 << 20):
        try:
            vmem_cap = pltpu.get_tpu_info().vmem_capacity_bytes
        except Exception:
            vmem_cap = 64 << 20
        cp_kwargs["vmem_limit_bytes"] = int(min(vmem_need, vmem_cap - (8 << 20)))

    def make_in_specs(single_buffer_weights):
        res_kw = {"pipeline_mode": pl.Buffered(1)} if single_buffer_weights else {}
        return [
            pl.BlockSpec((TB, H), lambda i: (i, 0)),                 # x: streamed
            pl.BlockSpec((H, H), lambda i: (0, 0), **res_kw),        # w1 resident
            pl.BlockSpec((1, H), lambda i: (0, 0), **res_kw),        # b1
            pl.BlockSpec((H, H), lambda i: (0, 0), **res_kw),        # w2
            pl.BlockSpec((1, H), lambda i: (0, 0), **res_kw),        # b2
            pl.BlockSpec((1, H), lambda i: (0, 0), **res_kw),        # wv row
            pl.BlockSpec(memory_space=pltpu.MemorySpace.SMEM),       # bv scalar
        ]

    def run(single_buffer_weights):
        return pl.pallas_call(
            critic_kernel,
            out_shape=jax.ShapeDtypeStruct((num_tiles, TB), jnp.float32),
            grid=(num_tiles,),
            in_specs=make_in_specs(single_buffer_weights),
            out_specs=pl.BlockSpec((1, TB), lambda i: (i, 0)),       # lane-dense
            compiler_params=pltpu.CompilerParams(**cp_kwargs),
            cost_estimate=cost,
        )(x, w1c, b1f, w2c, b2f, wvf, bvf)

    try:
        out = run(True)
    except Exception:
        # pipeline_mode=pl.Buffered(1) unsupported on this jax version; the
        # default double-buffered resident weights are semantically identical.
        out = run(False)

    return out.reshape(B_pad)[:B][:, None]


def init_params(hidden_size, key):
    """Deterministic synthetic init (shapes match the PyTorch module)."""
    k1, k2, k3, k4, k5, k6 = jax.random.split(key, 6)
    scale = 1.0 / jnp.sqrt(hidden_size)
    # w1/w2 stored as [in, out] (transposed vs nn.Linear's [out, in]); wv as [1, H].
    w1 = jax.random.uniform(k1, (hidden_size, hidden_size), jnp.float32, -scale, scale)
    b1 = jax.random.uniform(k2, (1, hidden_size), jnp.float32, -scale, scale)
    w2 = jax.random.uniform(k3, (hidden_size, hidden_size), jnp.float32, -scale, scale)
    b2 = jax.random.uniform(k4, (1, hidden_size), jnp.float32, -scale, scale)
    wv = jax.random.uniform(k5, (1, hidden_size), jnp.float32, -scale, scale)
    bv = jax.random.uniform(k6, (1,), jnp.float32, -scale, scale)
    return {"w1": w1, "b1": b1, "w2": w2, "b2": b2, "wv": wv, "bv": bv}


def reference_forward(hidden, p):
    h1 = jnp.maximum(hidden @ p["w1"] + p["b1"], 0.0)
    h2 = jnp.maximum(h1 @ p["w2"] + p["b2"], 0.0)
    return h2 @ p["wv"].T + p["bv"]


if __name__ == "__main__":
    H = 32  # hidden_size
    key = jax.random.PRNGKey(0)
    kx1, kx2, kp = jax.random.split(key, 3)
    params = init_params(H, kp)

    hidden_small = jax.random.normal(kx1, (8, H), dtype=jnp.float32)
    hidden_big = jax.random.normal(kx2, (300, H), dtype=jnp.float32)
    ref_small = reference_forward(hidden_small, params)
    ref_big = reference_forward(hidden_big, params)

    # f32 path, single fat tile (strict check).
    out_small = jax.block_until_ready(
        decentralized_critic_forward(hidden_small, params, compute_dtype=jnp.float32))
    assert out_small.shape == (8, 1), out_small.shape
    assert jnp.allclose(out_small, ref_small, atol=1e-4, rtol=1e-4), "small-batch mismatch"

    # Odd batch -> single 304-row tile (padding-aware heuristic), f32 path.
    out_big = jax.block_until_ready(
        decentralized_critic_forward(hidden_big, params, compute_dtype=jnp.float32))
    assert out_big.shape == (300, 1), out_big.shape
    assert jnp.allclose(out_big, ref_big, atol=1e-4, rtol=1e-4), "fat-tile mismatch"

    # Forced multi-tile path: exercises the grid, the parallel axis and the
    # lane-dense (1, TB) output stores across several grid steps.
    out_tiled = jax.block_until_ready(
        decentralized_critic_forward(hidden_big, params, compute_dtype=jnp.float32,
                                     max_rows_per_tile=128))
    assert out_tiled.shape == (300, 1), out_tiled.shape
    assert jnp.allclose(out_tiled, ref_big, atol=1e-4, rtol=1e-4), "tiled-batch mismatch"

    # bf16-weight path (2x MXU throughput); tolerance loosened vs f32 reference.
    out_bf16 = jax.block_until_ready(
        decentralized_critic_forward(hidden_big, params, compute_dtype=jnp.bfloat16))
    assert out_bf16.shape == (300, 1), out_bf16.shape
    assert jnp.allclose(out_bf16, ref_big, atol=5e-2, rtol=5e-2), "bf16-path mismatch"

    print("KERNEL_OK")
</pallas_src>

<mosaic_0001>
module attributes {stable_mosaic.version = 11 : i64} {
  func.func @critic_kernel(%arg0: i32, %arg1: memref<8x32xf32, #tpu.memory_space<vmem>>, %arg2: memref<32x32xf32, #tpu.memory_space<vmem>>, %arg3: memref<1x32xf32, #tpu.memory_space<vmem>>, %arg4: memref<32x32xf32, #tpu.memory_space<vmem>>, %arg5: memref<1x32xf32, #tpu.memory_space<vmem>>, %arg6: memref<1x32xf32, #tpu.memory_space<vmem>>, %arg7: memref<1xf32, #tpu.memory_space<smem>>, %arg8: memref<1x8xf32, #tpu.memory_space<vmem>>) attributes {dimension_semantics = [#tpu.dimension_semantics<parallel>], iteration_bounds = array<i64: 1>, scalar_prefetch = 0 : i64, scratch_operands = 0 : i64, tpu.core_type = #tpu.core_type<tc>, window_params = [{transform_indices = @transform_0, window_bounds = array<i64: 8, 32>}, {pipeline_mode = #tpu.pipeline_mode<synchronous>, transform_indices = @transform_1, window_bounds = array<i64: 32, 32>}, {pipeline_mode = #tpu.pipeline_mode<synchronous>, transform_indices = @transform_2, window_bounds = array<i64: 1, 32>}, {pipeline_mode = #tpu.pipeline_mode<synchronous>, transform_indices = @transform_3, window_bounds = array<i64: 32, 32>}, {pipeline_mode = #tpu.pipeline_mode<synchronous>, transform_indices = @transform_4, window_bounds = array<i64: 1, 32>}, {pipeline_mode = #tpu.pipeline_mode<synchronous>, transform_indices = @transform_5, window_bounds = array<i64: 1, 32>}, {transform_indices = @transform_6, window_bounds = array<i64: 1>}, {transform_indices = @transform_7, window_bounds = array<i64: 1, 8>}]} {
    %c0 = arith.constant 0 : index
    %c0_0 = arith.constant 0 : index
    %0 = vector.load %arg1[%c0, %c0_0] : memref<8x32xf32, #tpu.memory_space<vmem>>, vector<8x32xf32>
    %c0_1 = arith.constant 0 : index
    %c0_2 = arith.constant 0 : index
    %1 = vector.load %arg2[%c0_1, %c0_2] : memref<32x32xf32, #tpu.memory_space<vmem>>, vector<32x32xf32>
    %cst = arith.constant dense<0.000000e+00> : vector<8x32xf32>
    %2 = tpu.matmul %0, %1, %cst {dimension_numbers = #tpu.dot_dimension_numbers<[1], [0], [0], [1], [0, 0, 1, 1], [], []>} : vector<8x32xf32>, vector<32x32xf32>, vector<8x32xf32> -> vector<8x32xf32>
    %c0_3 = arith.constant 0 : index
    %c0_4 = arith.constant 0 : index
    %3 = vector.load %arg3[%c0_3, %c0_4] : memref<1x32xf32, #tpu.memory_space<vmem>>, vector<1x32xf32>
    %4 = vector.broadcast %3 : vector<1x32xf32> to vector<8x32xf32>
    %5 = arith.addf %2, %4 : vector<8x32xf32>
    %cst_5 = arith.constant 0.000000e+00 : f32
    %6 = vector.broadcast %cst_5 : f32 to vector<8x32xf32>
    %7 = arith.maximumf %5, %6 : vector<8x32xf32>
    %c0_6 = arith.constant 0 : index
    %c0_7 = arith.constant 0 : index
    %8 = vector.load %arg4[%c0_6, %c0_7] : memref<32x32xf32, #tpu.memory_space<vmem>>, vector<32x32xf32>
    %cst_8 = arith.constant dense<0.000000e+00> : vector<8x32xf32>
    %9 = tpu.matmul %7, %8, %cst_8 {dimension_numbers = #tpu.dot_dimension_numbers<[1], [0], [0], [1], [0, 0, 1, 1], [], []>} : vector<8x32xf32>, vector<32x32xf32>, vector<8x32xf32> -> vector<8x32xf32>
    %c0_9 = arith.constant 0 : index
    %c0_10 = arith.constant 0 : index
    %10 = vector.load %arg5[%c0_9, %c0_10] : memref<1x32xf32, #tpu.memory_space<vmem>>, vector<1x32xf32>
    %11 = vector.broadcast %10 : vector<1x32xf32> to vector<8x32xf32>
    %12 = arith.addf %9, %11 : vector<8x32xf32>
    %cst_11 = arith.constant 0.000000e+00 : f32
    %13 = vector.broadcast %cst_11 : f32 to vector<8x32xf32>
    %14 = arith.maximumf %12, %13 : vector<8x32xf32>
    %c0_12 = arith.constant 0 : index
    %c0_13 = arith.constant 0 : index
    %15 = vector.load %arg6[%c0_12, %c0_13] : memref<1x32xf32, #tpu.memory_space<vmem>>, vector<1x32xf32>
    %16 = vector.broadcast %15 : vector<1x32xf32> to vector<8x32xf32>
    %17 = arith.mulf %14, %16 : vector<8x32xf32>
    %cst_14 = arith.constant dense<0.000000e+00> : vector<8xf32>
    %18 = vector.multi_reduction <add>, %17, %cst_14 [1] : vector<8x32xf32> to vector<8xf32>
    %c0_15 = arith.constant 0 : index
    %19 = memref.load %arg7[%c0_15] : memref<1xf32, #tpu.memory_space<smem>>
    %20 = vector.broadcast %19 : f32 to vector<8xf32>
    %21 = arith.addf %18, %20 : vector<8xf32>
    %22 = vector.shape_cast %21 : vector<8xf32> to vector<1x8xf32>
    %c0_16 = arith.constant 0 : index
    %c0_17 = arith.constant 0 : index
    %23 = vector.load %arg8[%c0_16, %c0_17] : memref<1x8xf32, #tpu.memory_space<vmem>>, vector<1x8xf32>
    tpu.vector_store %arg8[%c0_16, %c0_17], %22 {strides = array<i32>} : memref<1x8xf32, #tpu.memory_space<vmem>>, vector<1x8xf32>,
    return
  }
  func.func @transform_0(%arg0: i32) -> (i32, i32) {
    %c0_i32 = arith.constant 0 : i32
    %c0_i32_0 = arith.constant 0 : i32
    return %arg0, %c0_i32 : i32, i32
  }
  func.func @transform_1(%arg0: i32) -> (i32, i32) {
    %c0_i32 = arith.constant 0 : i32
    %c0_i32_0 = arith.constant 0 : i32
    %c0_i32_1 = arith.constant 0 : i32
    return %c0_i32, %c0_i32_0 : i32, i32
  }
  func.func @transform_2(%arg0: i32) -> (i32, i32) {
    %c0_i32 = arith.constant 0 : i32
    %c0_i32_0 = arith.constant 0 : i32
    %c0_i32_1 = arith.constant 0 : i32
    return %c0_i32, %c0_i32_0 : i32, i32
  }
  func.func @transform_3(%arg0: i32) -> (i32, i32) {
    %c0_i32 = arith.constant 0 : i32
    %c0_i32_0 = arith.constant 0 : i32
    %c0_i32_1 = arith.constant 0 : i32
    return %c0_i32, %c0_i32_0 : i32, i32
  }
  func.func @transform_4(%arg0: i32) -> (i32, i32) {
    %c0_i32 = arith.constant 0 : i32
    %c0_i32_0 = arith.constant 0 : i32
    %c0_i32_1 = arith.constant 0 : i32
    return %c0_i32, %c0_i32_0 : i32, i32
  }
  func.func @transform_5(%arg0: i32) -> (i32, i32) {
    %c0_i32 = arith.constant 0 : i32
    %c0_i32_0 = arith.constant 0 : i32
    %c0_i32_1 = arith.constant 0 : i32
    return %c0_i32, %c0_i32_0 : i32, i32
  }
  func.func @transform_6(%arg0: i32) -> i32 {
    %c0_i32 = arith.constant 0 : i32
    %c0_i32_0 = arith.constant 0 : i32
    return %c0_i32 : i32
  }
  func.func @transform_7(%arg0: i32) -> (i32, i32) {
    %c0_i32 = arith.constant 0 : i32
    %c0_i32_0 = arith.constant 0 : i32
    return %arg0, %c0_i32 : i32, i32
  }
}

module attributes {stable_mosaic.version = 11 : i64} {
  func.func @critic_kernel(%arg0: i32, %arg1: memref<8x32xf32, #tpu.memory_space<vmem>>, %arg2: memref<32x32xf32, #tpu.memory_space<vmem>>, %arg3: memref<1x32xf32, #tpu.memory_space<vmem>>, %arg4: memref<32x32xf32, #tpu.memory_space<vmem>>, %arg5: memref<1x32xf32, #tpu.memory_space<vmem>>, %arg6: memref<1x32xf32, #tpu.memory_space<vmem>>, %arg7: memref<1xf32, #tpu.memory_space<smem>>, %arg8: memref<1x8xf32, #tpu.memory_space<vmem>>) attributes {dimension_semantics = [#tpu.dimension_semantics<parallel>], iteration_bounds = array<i64: 1>, scalar_prefetch = 0 : i64, scratch_operands = 0 : i64, tpu.core_type = #tpu.core_type<tc>, window_params = [{transform_indices = @transform_0, window_bounds = array<i64: 8, 32>}, {pipeline_mode = #tpu.pipeline_mode<synchronous>, transform_indices = @transform_1, window_bounds = array<i64: 32, 32>}, {pipeline_mode = #tpu.pipeline_mode<synchronous>, transform_indices = @transform_2, window_bounds = array<i64: 1, 32>}, {pipeline_mode = #tpu.pipeline_mode<synchronous>, transform_indices = @transform_3, window_bounds = array<i64: 32, 32>}, {pipeline_mode = #tpu.pipeline_mode<synchronous>, transform_indices = @transform_4, window_bounds = array<i64: 1, 32>}, {pipeline_mode = #tpu.pipeline_mode<synchronous>, transform_indices = @transform_5, window_bounds = array<i64: 1, 32>}, {transform_indices = @transform_6, window_bounds = array<i64: 1>}, {transform_indices = @transform_7, window_bounds = array<i64: 1, 8>}]} {
    %c0 = arith.constant 0 : index
    %c0_0 = arith.constant 0 : index
    %0 = vector.load %arg1[%c0, %c0_0] : memref<8x32xf32, #tpu.memory_space<vmem>>, vector<8x32xf32>
    %c0_1 = arith.constant 0 : index
    %c0_2 = arith.constant 0 : index
    %1 = vector.load %arg2[%c0_1, %c0_2] : memref<32x32xf32, #tpu.memory_space<vmem>>, vector<32x32xf32>
    %cst = arith.constant dense<0.000000e+00> : vector<8x32xf32>
    %2 = tpu.matmul %0, %1, %cst {dimension_numbers = #tpu.dot_dimension_numbers<[1], [0], [0], [1], [0, 0, 1, 1], [], []>} : vector<8x32xf32>, vector<32x32xf32>, vector<8x32xf32> -> vector<8x32xf32>
    %c0_3 = arith.constant 0 : index
    %c0_4 = arith.constant 0 : index
    %3 = vector.load %arg3[%c0_3, %c0_4] : memref<1x32xf32, #tpu.memory_space<vmem>>, vector<1x32xf32>
    %4 = vector.broadcast %3 : vector<1x32xf32> to vector<8x32xf32>
    %5 = arith.addf %2, %4 : vector<8x32xf32>
    %cst_5 = arith.constant 0.000000e+00 : f32
    %6 = vector.broadcast %cst_5 : f32 to vector<8x32xf32>
    %7 = arith.maximumf %5, %6 : vector<8x32xf32>
    %c0_6 = arith.constant 0 : index
    %c0_7 = arith.constant 0 : index
    %8 = vector.load %arg4[%c0_6, %c0_7] : memref<32x32xf32, #tpu.memory_space<vmem>>, vector<32x32xf32>
    %cst_8 = arith.constant dense<0.000000e+00> : vector<8x32xf32>
    %9 = tpu.matmul %7, %8, %cst_8 {dimension_numbers = #tpu.dot_dimension_numbers<[1], [0], [0], [1], [0, 0, 1, 1], [], []>} : vector<8x32xf32>, vector<32x32xf32>, vector<8x32xf32> -> vector<8x32xf32>
    %c0_9 = arith.constant 0 : index
    %c0_10 = arith.constant 0 : index
    %10 = vector.load %arg5[%c0_9, %c0_10] : memref<1x32xf32, #tpu.memory_space<vmem>>, vector<1x32xf32>
    %11 = vector.broadcast %10 : vector<1x32xf32> to vector<8x32xf32>
    %12 = arith.addf %9, %11 : vector<8x32xf32>
    %cst_11 = arith.constant 0.000000e+00 : f32
    %13 = vector.broadcast %cst_11 : f32 to vector<8x32xf32>
    %14 = arith.maximumf %12, %13 : vector<8x32xf32>
    %c0_12 = arith.constant 0 : index
    %c0_13 = arith.constant 0 : index
    %15 = vector.load %arg6[%c0_12, %c0_13] : memref<1x32xf32, #tpu.memory_space<vmem>>, vector<1x32xf32>
    %16 = vector.broadcast %15 : vector<1x32xf32> to vector<8x32xf32>
    %17 = arith.mulf %14, %16 : vector<8x32xf32>
    %cst_14 = arith.constant dense<0.000000e+00> : vector<8xf32>
    %18 = vector.multi_reduction <add>, %17, %cst_14 [1] : vector<8x32xf32> to vector<8xf32>
    %c0_15 = arith.constant 0 : index
    %19 = memref.load %arg7[%c0_15] : memref<1xf32, #tpu.memory_space<smem>>
    %20 = vector.broadcast %19 : f32 to vector<8xf32>
    %21 = arith.addf %18, %20 : vector<8xf32>
    %22 = vector.shape_cast %21 : vector<8xf32> to vector<1x8xf32>
    %c0_16 = arith.constant 0 : index
    %c0_17 = arith.constant 0 : index
    %23 = vector.load %arg8[%c0_16, %c0_17] : memref<1x8xf32, #tpu.memory_space<vmem>>, vector<1x8xf32>
    tpu.vector_store %arg8[%c0_16, %c0_17], %22 {strides = array<i32>} : memref<1x8xf32, #tpu.memory_space<vmem>>, vector<1x8xf32>,
    return
  }
  func.func @transform_0(%arg0: i32) -> (i32, i32) {
    %c0_i32 = arith.constant 0 : i32
    %c0_i32_0 = arith.constant 0 : i32
    return %arg0, %c0_i32 : i32, i32
  }
  func.func @transform_1(%arg0: i32) -> (i32, i32) {
    %c0_i32 = arith.constant 0 : i32
    %c0_i32_0 = arith.constant 0 : i32
    %c0_i32_1 = arith.constant 0 : i32
    return %c0_i32, %c0_i32_0 : i32, i32
  }
  func.func @transform_2(%arg0: i32) -> (i32, i32) {
    %c0_i32 = arith.constant 0 : i32
    %c0_i32_0 = arith.constant 0 : i32
    %c0_i32_1 = arith.constant 0 : i32
    return %c0_i32, %c0_i32_0 : i32, i32
  }
  func.func @transform_3(%arg0: i32) -> (i32, i32) {
    %c0_i32 = arith.constant 0 : i32
    %c0_i32_0 = arith.constant 0 : i32
    %c0_i32_1 = arith.constant 0 : i32
    return %c0_i32, %c0_i32_0 : i32, i32
  }
  func.func @transform_4(%arg0: i32) -> (i32, i32) {
    %c0_i32 = arith.constant 0 : i32
    %c0_i32_0 = arith.constant 0 : i32
    %c0_i32_1 = arith.constant 0 : i32
    return %c0_i32, %c0_i32_0 : i32, i32
  }
  func.func @transform_5(%arg0: i32) -> (i32, i32) {
    %c0_i32 = arith.constant 0 : i32
    %c0_i32_0 = arith.constant 0 : i32
    %c0_i32_1 = arith.constant 0 : i32
    return %c0_i32, %c0_i32_0 : i32, i32
  }
  func.func @transform_6(%arg0: i32) -> i32 {
    %c0_i32 = arith.constant 0 : i32
    %c0_i32_0 = arith.constant 0 : i32
    return %c0_i32 : i32
  }
  func.func @transform_7(%arg0: i32) -> (i32, i32) {
    %c0_i32 = arith.constant 0 : i32
    %c0_i32_0 = arith.constant 0 : i32
    return %arg0, %c0_i32 : i32, i32
  }
}

</mosaic_0001>

<llo_original>
// kernel: tpu_custom_call.1
$region0: #{tpu_custom_call.1}
  #allocation0 [shape = 'u32[]', space=smem, size = 0x4, offset = 0x4, fixed_abs, tag = 'smem constant byte address 0x4 - core index']
  #allocation1 [shape = 'u32[72,128]{1,0:T(1,128)}', space=vmem, size = 0x9000, scoped, tag = 'internal scratch']
  #allocation2 [shape = 'f32[1]{0:T(128)S(6)}', space=smem, size = 0x200, scoped, tag = 'scoped memory for tpu_custom_call.1']
  %s0 = inlined_call_operand.hbm [shape: f32[8,32], index: 0, kind: input, shape index: {}]
  %s1 = inlined_call_operand.hbm [shape: f32[32,32], index: 1, kind: input, shape index: {}]
  %s2 = inlined_call_operand.vmem [shape: f32[1,32], index: 2, kind: input, shape index: {}]
  %s3 = inlined_call_operand.hbm [shape: f32[32,32], index: 3, kind: input, shape index: {}]
  %s4 = inlined_call_operand.vmem [shape: f32[1,32], index: 4, kind: input, shape index: {}]
  %s5 = inlined_call_operand.vmem [shape: f32[1,32], index: 5, kind: input, shape index: {}]
  %s6 = inlined_call_operand.<no memory space> [shape: f32[1], index: 6, kind: input, shape index: {}]
  %s7 = inlined_call_operand.hbm [shape: f32[1,8], index: 7, kind: output, shape index: {}]
  %s8 = sld [smem:[#allocation0]]
  $region50: #{tpu_custom_call.1} parent=0
    _
  %s10 = ssub.s32 1, %s8
  %s11 = scalar_select 0, %s10, %s8
  %12 = sst [smem:[#allocation2]] %s6
  $region1: #{tpu_custom_call.1} parent=0
    #allocation3 [shape = 'u8[4096]{0}', space=vmem, size = 0x1000, scoped, tag = 'input window, operand 0, single buffered']
    #allocation4 [shape = 's32[1]{0}', space=sflag, size = 0x4, scoped, tag = 'scoped memory for tpu_custom_call.1']
    #allocation5 [shape = 's32[1]{0}', space=sflag, size = 0x4, scoped, tag = 'scoped memory for tpu_custom_call.1']
    #allocation6 [shape = 'u8[16384]{0}', space=vmem, size = 0x4000, scoped, tag = 'input window, operand 1, single buffered']
    #allocation7 [shape = 's32[1]{0}', space=sflag, size = 0x4, scoped, tag = 'scoped memory for tpu_custom_call.1']
    #allocation8 [shape = 'u8[16384]{0}', space=vmem, size = 0x4000, scoped, tag = 'input window, operand 3, single buffered']
    #allocation9 [shape = 'u8[512]{0}', space=vmem, size = 0x400, scoped, tag = 'output window, operand 0, single buffered']
    %13 = vsyncpa [#allocation4], 0
    %14 = vsyncpa [#allocation7], 0
    %15 = vsyncpa [#allocation5], 0
    // Predicated region
    $region2: #{tpu_custom_call.1} parent=1 // pred_check
      _
    $region3: #{tpu_custom_call.1} parent=1 // pred_check_branch
      %17 = sbr.rel (0) target = $region5
    $region4: #{tpu_custom_call.1} parent=1 // pred_region
      %19 = vsyncadd [#allocation4], 0
      %s21 = sshll.u32 %s0, 4
      %s22 = int_to_ptr.hbm [resolvable:$true] %s21
      %s23 = sshll.u32 [#allocation3], 4
      %s24 = int_to_ptr.vmem [resolvable:$true] %s23
      %26 = dma.hbm_to_vmem [thread:$0]  %s22, 128, %s24, [#allocation4]
    $region5: #{tpu_custom_call.1} parent=1 // pred_fallthru
      _
    // Predicated region
    $region6: #{tpu_custom_call.1} parent=1 // pred_check
      _
    $region7: #{tpu_custom_call.1} parent=1 // pred_check_branch
      %28 = sbr.rel (0) target = $region9
    $region8: #{tpu_custom_call.1} parent=1 // pred_region
      %30 = vsyncadd [#allocation7], 0
      %s31 = sshll.u32 %s1, 4
      %s32 = int_to_ptr.hbm [resolvable:$true] %s31
      %s33 = sshll.u32 [#allocation6], 4
      %s34 = int_to_ptr.vmem [resolvable:$true] %s33
      %39 = dma.hbm_to_vmem [thread:$0]  %s32, 512, %s34, [#allocation7], 128, 128, 8
    $region9: #{tpu_custom_call.1} parent=1 // pred_fallthru
      _
    // Predicated region
    $region10: #{tpu_custom_call.1} parent=1 // pred_check
      _
    $region11: #{tpu_custom_call.1} parent=1 // pred_check_branch
      %41 = sbr.rel (0) target = $region13
    $region12: #{tpu_custom_call.1} parent=1 // pred_region
      _
    $region13: #{tpu_custom_call.1} parent=1 // pred_fallthru
      _
    // Predicated region
    $region14: #{tpu_custom_call.1} parent=1 // pred_check
      _
    $region15: #{tpu_custom_call.1} parent=1 // pred_check_branch
      %43 = sbr.rel (0) target = $region17
    $region16: #{tpu_custom_call.1} parent=1 // pred_region
      %45 = vsyncadd [#allocation7], 0
      %s46 = sshll.u32 %s3, 4
      %s47 = int_to_ptr.hbm [resolvable:$true] %s46
      %s48 = sshll.u32 [#allocation8], 4
      %s49 = int_to_ptr.vmem [resolvable:$true] %s48
      %54 = dma.hbm_to_vmem [thread:$0]  %s47, 512, %s49, [#allocation7], 128, 128, 8
    $region17: #{tpu_custom_call.1} parent=1 // pred_fallthru
      _
    // Predicated region
    $region18: #{tpu_custom_call.1} parent=1 // pred_check
      _
    $region19: #{tpu_custom_call.1} parent=1 // pred_check_branch
      %56 = sbr.rel (0) target = $region21
    $region20: #{tpu_custom_call.1} parent=1 // pred_region
      _
    $region21: #{tpu_custom_call.1} parent=1 // pred_fallthru
      _
    // Predicated region
    $region22: #{tpu_custom_call.1} parent=1 // pred_check
      _
    $region23: #{tpu_custom_call.1} parent=1 // pred_check_branch
      %58 = sbr.rel (0) target = $region25
    $region24: #{tpu_custom_call.1} parent=1 // pred_region
      _
    $region25: #{tpu_custom_call.1} parent=1 // pred_fallthru
      _
    // Predicated region
    $region26: #{tpu_custom_call.1} parent=1 // pred_check
      _
    $region27: #{tpu_custom_call.1} parent=1 // pred_check_branch
      %60 = sbr.rel (0) target = $region29
    $region28: #{tpu_custom_call.1} parent=1 // pred_region
      _
    $region29: #{tpu_custom_call.1} parent=1 // pred_fallthru
      _
    // Predicated region
    $region30: #{tpu_custom_call.1} parent=1 // pred_check
      _
    $region31: #{tpu_custom_call.1} parent=1 // pred_check_branch
      %62 = sbr.rel (0) target = $region33
    $region32: #{tpu_custom_call.1} parent=1 // pred_region
      %64 = dma.done [#allocation4], 128
    $region33: #{tpu_custom_call.1} parent=1 // pred_fallthru
      _
    // Predicated region
    $region34: #{tpu_custom_call.1} parent=1 // pred_check
      _
    $region35: #{tpu_custom_call.1} parent=1 // pred_check_branch
      %66 = sbr.rel (0) target = $region37
    $region36: #{tpu_custom_call.1} parent=1 // pred_region
      %68 = dma.done [#allocation7], 512
    $region37: #{tpu_custom_call.1} parent=1 // pred_fallthru
      _
    // Predicated region
    $region38: #{tpu_custom_call.1} parent=1 // pred_check
      _
    $region39: #{tpu_custom_call.1} parent=1 // pred_check_branch
      %70 = sbr.rel (0) target = $region41
    $region40: #{tpu_custom_call.1} parent=1 // pred_region
      %72 = dma.done [#allocation7], 512
    $region41: #{tpu_custom_call.1} parent=1 // pred_fallthru
      _
    %v73 = vld [vmem:[#allocation3] sm:$0xff]
    %v74 = vld [vmem:[#allocation6] sm:$0xff]
    %v75 = vld [vmem:[#allocation6 + $0x8] sm:$0xff]
    %v76 = vld [vmem:[#allocation6 + $0x10] sm:$0xff]
    %v77 = vld [vmem:[#allocation6 + $0x18] sm:$0xff]
    %v78 = vld [vmem:[%s2] sm:$0x1]
    %v80 = vperm.slane %v78, 0
    %vm82 = vcmask 261120
    %v84 = vsel %vm82, %v73, 0
    %86 = vmatpush.msra.mxu0 0.0
    %87 = vmatpush.msra.mxu0 0.0
    %88 = vmatpush.msra.mxu0 0.0
    %89 = vmatpush.msra.mxu0 0.0
    %90 = vmatpush.msra.mxu0 0.0
    %91 = vmatpush.msra.mxu0 0.0
    %92 = vmatpush.msra.mxu0 0.0
    %93 = vmatpush.msra.mxu0 0.0
    %94 = vmatpush.msra.mxu0 0.0
    %95 = vmatpush.msra.mxu0 0.0
    %96 = vmatpush.msra.mxu0 0.0
    %97 = vmatpush.msra.mxu0 0.0
    %98 = vmatpush.msra.mxu0 %v77
    %99 = vmatpush.msra.mxu0 %v76
    %100 = vmatpush.msra.mxu0 %v75
    %101 = vmatpush.msra.mxu0 %v74
    %102 = vmatmul.f32.gmra.mxu0 %v84
    %v103 = vpop.f32.mrf.mxu0
    %v104 = vadd.f32 %v80, %v103
    %105 = vdwg.mxu0
    %v106 = vmax.f32 %v104, 0.0
    %v107 = vld [vmem:[#allocation8] sm:$0xff]
    %v108 = vld [vmem:[#allocation8 + $0x8] sm:$0xff]
    %v109 = vld [vmem:[#allocation8 + $0x10] sm:$0xff]
    %v110 = vld [vmem:[#allocation8 + $0x18] sm:$0xff]
    %v111 = vld [vmem:[%s4] sm:$0x1]
    %v113 = vperm.slane %v111, 0
    %v116 = vsel %vm82, %v106, 0
    %118 = vmatpush.msra.mxu0 0.0
    %119 = vmatpush.msra.mxu0 0.0
    %120 = vmatpush.msra.mxu0 0.0
    %121 = vmatpush.msra.mxu0 0.0
    %122 = vmatpush.msra.mxu0 0.0
    %123 = vmatpush.msra.mxu0 0.0
    %124 = vmatpush.msra.mxu0 0.0
    %125 = vmatpush.msra.mxu0 0.0
    %126 = vmatpush.msra.mxu0 0.0
    %127 = vmatpush.msra.mxu0 0.0
    %128 = vmatpush.msra.mxu0 0.0
    %129 = vmatpush.msra.mxu0 0.0
    %130 = vmatpush.msra.mxu0 %v110
    %131 = vmatpush.msra.mxu0 %v109
    %132 = vmatpush.msra.mxu0 %v108
    %133 = vmatpush.msra.mxu0 %v107
    %134 = vmatmul.f32.gmra.mxu0 %v116
    %v135 = vpop.f32.mrf.mxu0
    %v136 = vadd.f32 %v113, %v135
    %137 = vdwg.mxu0
    %v138 = vmax.f32 %v136, 0.0
    %v139 = vld [vmem:[%s5] sm:$0x1]
    %v141 = vperm.slane %v139, 0
    %v143 = vmul.f32 %v138, %v141
    %v144 = vsel %vm82, %v143, 0.0
    %145 = vadd.xlane.f32.xlu0 %v144
    %v146 = vpop.xlane.xlu0 %145
    %s147 = sld [smem:[#allocation2]]
    %v148 = vstv %s147
    %v149 = vadd.f32 %v146, %v148
    %v151 = vlaneseq
    %v152 = vand.u32 %v151, 127
    %v153 = vperm.slane %v149, %v152
    %vm155 = vcmask 57344
    %156 = vst.msk [vmem:[#allocation9] sm:$0x1] %vm155, %v153
    // Predicated region
    $region42: #{tpu_custom_call.1} parent=1 // pred_check
      _
    $region43: #{tpu_custom_call.1} parent=1 // pred_check_branch
      %158 = sbr.rel (0) target = $region45
    $region44: #{tpu_custom_call.1} parent=1 // pred_region
      %160 = vsyncadd [#allocation5], 0
      %s162 = sshll.u32 [#allocation9], 4
      %s163 = int_to_ptr.vmem [resolvable:$true] %s162
      %s164 = sshll.u32 %s7, 4
      %s165 = int_to_ptr.hbm [resolvable:$true] %s164
      %167 = dma.vmem_to_hbm [thread:$0]  %s163, 16, %s165, [#allocation5]
    $region45: #{tpu_custom_call.1} parent=1 // pred_fallthru
      _
    // Predicated region
    $region46: #{tpu_custom_call.1} parent=1 // pred_check
      _
    $region47: #{tpu_custom_call.1} parent=1 // pred_check_branch
      %169 = sbr.rel (0) target = $region49
    $region48: #{tpu_custom_call.1} parent=1 // pred_region
      %171 = dma.done [#allocation5], 16
    $region49: #{tpu_custom_call.1} parent=1 // pred_fallthru
      _
    %172 = vsyncpa [#allocation4], 1
    %173 = vsyncpa [#allocation7], 1
    %174 = vsyncpa [#allocation5], 1

// kernel: tpu_custom_call.1
$region0: #{tpu_custom_call.1}
  #allocation0 [shape = 'u32[]', space=smem, size = 0x4, offset = 0x4, fixed_abs, tag = 'smem constant byte address 0x4 - core index']
  #allocation1 [shape = 'u32[72,128]{1,0:T(1,128)}', space=vmem, size = 0x9000, scoped, tag = 'internal scratch']
  #allocation2 [shape = 'f32[1]{0:T(128)S(6)}', space=smem, size = 0x200, scoped, tag = 'scoped memory for tpu_custom_call.1']
  %s0 = inlined_call_operand.hbm [shape: f32[8,32], index: 0, kind: input, shape index: {}]
  %s1 = inlined_call_operand.hbm [shape: f32[32,32], index: 1, kind: input, shape index: {}]
  %s2 = inlined_call_operand.vmem [shape: f32[1,32], index: 2, kind: input, shape index: {}]
  %s3 = inlined_call_operand.hbm [shape: f32[32,32], index: 3, kind: input, shape index: {}]
  %s4 = inlined_call_operand.vmem [shape: f32[1,32], index: 4, kind: input, shape index: {}]
  %s5 = inlined_call_operand.vmem [shape: f32[1,32], index: 5, kind: input, shape index: {}]
  %s6 = inlined_call_operand.<no memory space> [shape: f32[1], index: 6, kind: input, shape index: {}]
  %s7 = inlined_call_operand.hbm [shape: f32[1,8], index: 7, kind: output, shape index: {}]
  %s8 = sld [smem:[#allocation0]]
  $region50: #{tpu_custom_call.1} parent=0
    _
  %s10 = ssub.s32 1, %s8
  %s11 = scalar_select 0, %s10, %s8
  %12 = sst [smem:[#allocation2]] %s6
  $region1: #{tpu_custom_call.1} parent=0
    #allocation3 [shape = 'u8[4096]{0}', space=vmem, size = 0x1000, scoped, tag = 'input window, operand 0, single buffered']
    #allocation4 [shape = 's32[1]{0}', space=sflag, size = 0x4, scoped, tag = 'scoped memory for tpu_custom_call.1']
    #allocation5 [shape = 's32[1]{0}', space=sflag, size = 0x4, scoped, tag = 'scoped memory for tpu_custom_call.1']
    #allocation6 [shape = 'u8[16384]{0}', space=vmem, size = 0x4000, scoped, tag = 'input window, operand 1, single buffered']
    #allocation7 [shape = 's32[1]{0}', space=sflag, size = 0x4, scoped, tag = 'scoped memory for tpu_custom_call.1']
    #allocation8 [shape = 'u8[16384]{0}', space=vmem, size = 0x4000, scoped, tag = 'input window, operand 3, single buffered']
    #allocation9 [shape = 'u8[512]{0}', space=vmem, size = 0x400, scoped, tag = 'output window, operand 0, single buffered']
    %13 = vsyncpa [#allocation4], 0
    %14 = vsyncpa [#allocation7], 0
    %15 = vsyncpa [#allocation5], 0
    // Predicated region
    $region2: #{tpu_custom_call.1} parent=1 // pred_check
      _
    $region3: #{tpu_custom_call.1} parent=1 // pred_check_branch
      %17 = sbr.rel (0) target = $region5
    $region4: #{tpu_custom_call.1} parent=1 // pred_region
      %19 = vsyncadd [#allocation4], 0
      %s21 = sshll.u32 %s0, 4
      %s22 = int_to_ptr.hbm [resolvable:$true] %s21
      %s23 = sshll.u32 [#allocation3], 4
      %s24 = int_to_ptr.vmem [resolvable:$true] %s23
      %26 = dma.hbm_to_vmem [thread:$0]  %s22, 128, %s24, [#allocation4]
    $region5: #{tpu_custom_call.1} parent=1 // pred_fallthru
      _
    // Predicated region
    $region6: #{tpu_custom_call.1} parent=1 // pred_check
      _
    $region7: #{tpu_custom_call.1} parent=1 // pred_check_branch
      %28 = sbr.rel (0) target = $region9
    $region8: #{tpu_custom_call.1} parent=1 // pred_region
      %30 = vsyncadd [#allocation7], 0
      %s31 = sshll.u32 %s1, 4
      %s32 = int_to_ptr.hbm [resolvable:$true] %s31
      %s33 = sshll.u32 [#allocation6], 4
      %s34 = int_to_ptr.vmem [resolvable:$true] %s33
      %39 = dma.hbm_to_vmem [thread:$0]  %s32, 512, %s34, [#allocation7], 128, 128, 8
    $region9: #{tpu_custom_call.1} parent=1 // pred_fallthru
      _
    // Predicated region
    $region10: #{tpu_custom_call.1} parent=1 // pred_check
      _
    $region11: #{tpu_custom_call.1} parent=1 // pred_check_branch
      %41 = sbr.rel (0) target = $region13
    $region12: #{tpu_custom_call.1} parent=1 // pred_region
      _
    $region13: #{tpu_custom_call.1} parent=1 // pred_fallthru
      _
    // Predicated region
    $region14: #{tpu_custom_call.1} parent=1 // pred_check
      _
    $region15: #{tpu_custom_call.1} parent=1 // pred_check_branch
      %43 = sbr.rel (0) target = $region17
    $region16: #{tpu_custom_call.1} parent=1 // pred_region
      %45 = vsyncadd [#allocation7], 0
      %s46 = sshll.u32 %s3, 4
      %s47 = int_to_ptr.hbm [resolvable:$true] %s46
      %s48 = sshll.u32 [#allocation8], 4
      %s49 = int_to_ptr.vmem [resolvable:$true] %s48
      %54 = dma.hbm_to_vmem [thread:$0]  %s47, 512, %s49, [#allocation7], 128, 128, 8
    $region17: #{tpu_custom_call.1} parent=1 // pred_fallthru
      _
    // Predicated region
    $region18: #{tpu_custom_call.1} parent=1 // pred_check
      _
    $region19: #{tpu_custom_call.1} parent=1 // pred_check_branch
      %56 = sbr.rel (0) target = $region21
    $region20: #{tpu_custom_call.1} parent=1 // pred_region
      _
    $region21: #{tpu_custom_call.1} parent=1 // pred_fallthru
      _
    // Predicated region
    $region22: #{tpu_custom_call.1} parent=1 // pred_check
      _
    $region23: #{tpu_custom_call.1} parent=1 // pred_check_branch
      %58 = sbr.rel (0) target = $region25
    $region24: #{tpu_custom_call.1} parent=1 // pred_region
      _
    $region25: #{tpu_custom_call.1} parent=1 // pred_fallthru
      _
    // Predicated region
    $region26: #{tpu_custom_call.1} parent=1 // pred_check
      _
    $region27: #{tpu_custom_call.1} parent=1 // pred_check_branch
      %60 = sbr.rel (0) target = $region29
    $region28: #{tpu_custom_call.1} parent=1 // pred_region
      _
    $region29: #{tpu_custom_call.1} parent=1 // pred_fallthru
      _
    // Predicated region
    $region30: #{tpu_custom_call.1} parent=1 // pred_check
      _
    $region31: #{tpu_custom_call.1} parent=1 // pred_check_branch
      %62 = sbr.rel (0) target = $region33
    $region32: #{tpu_custom_call.1} parent=1 // pred_region
      %64 = dma.done [#allocation4], 128
    $region33: #{tpu_custom_call.1} parent=1 // pred_fallthru
      _
    // Predicated region
    $region34: #{tpu_custom_call.1} parent=1 // pred_check
      _
    $region35: #{tpu_custom_call.1} parent=1 // pred_check_branch
      %66 = sbr.rel (0) target = $region37
    $region36: #{tpu_custom_call.1} parent=1 // pred_region
      %68 = dma.done [#allocation7], 512
    $region37: #{tpu_custom_call.1} parent=1 // pred_fallthru
      _
    // Predicated region
    $region38: #{tpu_custom_call.1} parent=1 // pred_check
      _
    $region39: #{tpu_custom_call.1} parent=1 // pred_check_branch
      %70 = sbr.rel (0) target = $region41
    $region40: #{tpu_custom_call.1} parent=1 // pred_region
      %72 = dma.done [#allocation7], 512
    $region41: #{tpu_custom_call.1} parent=1 // pred_fallthru
      _
    %v73 = vld [vmem:[#allocation3] sm:$0xff]
    %v74 = vld [vmem:[#allocation6] sm:$0xff]
    %v75 = vld [vmem:[#allocation6 + $0x8] sm:$0xff]
    %v76 = vld [vmem:[#allocation6 + $0x10] sm:$0xff]
    %v77 = vld [vmem:[#allocation6 + $0x18] sm:$0xff]
    %v78 = vld [vmem:[%s2] sm:$0x1]
    %v80 = vperm.slane %v78, 0
    %vm82 = vcmask 261120
    %v84 = vsel %vm82, %v73, 0
    %86 = vmatpush.msra.mxu0 0.0
    %87 = vmatpush.msra.mxu0 0.0
    %88 = vmatpush.msra.mxu0 0.0
    %89 = vmatpush.msra.mxu0 0.0
    %90 = vmatpush.msra.mxu0 0.0
    %91 = vmatpush.msra.mxu0 0.0
    %92 = vmatpush.msra.mxu0 0.0
    %93 = vmatpush.msra.mxu0 0.0
    %94 = vmatpush.msra.mxu0 0.0
    %95 = vmatpush.msra.mxu0 0.0
    %96 = vmatpush.msra.mxu0 0.0
    %97 = vmatpush.msra.mxu0 0.0
    %98 = vmatpush.msra.mxu0 %v77
    %99 = vmatpush.msra.mxu0 %v76
    %100 = vmatpush.msra.mxu0 %v75
    %101 = vmatpush.msra.mxu0 %v74
    %102 = vmatmul.f32.gmra.mxu0 %v84
    %v103 = vpop.f32.mrf.mxu0
    %v104 = vadd.f32 %v80, %v103
    %105 = vdwg.mxu0
    %v106 = vmax.f32 %v104, 0.0
    %v107 = vld [vmem:[#allocation8] sm:$0xff]
    %v108 = vld [vmem:[#allocation8 + $0x8] sm:$0xff]
    %v109 = vld [vmem:[#allocation8 + $0x10] sm:$0xff]
    %v110 = vld [vmem:[#allocation8 + $0x18] sm:$0xff]
    %v111 = vld [vmem:[%s4] sm:$0x1]
    %v113 = vperm.slane %v111, 0
    %v116 = vsel %vm82, %v106, 0
    %118 = vmatpush.msra.mxu0 0.0
    %119 = vmatpush.msra.mxu0 0.0
    %120 = vmatpush.msra.mxu0 0.0
    %121 = vmatpush.msra.mxu0 0.0
    %122 = vmatpush.msra.mxu0 0.0
    %123 = vmatpush.msra.mxu0 0.0
    %124 = vmatpush.msra.mxu0 0.0
    %125 = vmatpush.msra.mxu0 0.0
    %126 = vmatpush.msra.mxu0 0.0
    %127 = vmatpush.msra.mxu0 0.0
    %128 = vmatpush.msra.mxu0 0.0
    %129 = vmatpush.msra.mxu0 0.0
    %130 = vmatpush.msra.mxu0 %v110
    %131 = vmatpush.msra.mxu0 %v109
    %132 = vmatpush.msra.mxu0 %v108
    %133 = vmatpush.msra.mxu0 %v107
    %134 = vmatmul.f32.gmra.mxu0 %v116
    %v135 = vpop.f32.mrf.mxu0
    %v136 = vadd.f32 %v113, %v135
    %137 = vdwg.mxu0
    %v138 = vmax.f32 %v136, 0.0
    %v139 = vld [vmem:[%s5] sm:$0x1]
    %v141 = vperm.slane %v139, 0
    %v143 = vmul.f32 %v138, %v141
    %v144 = vsel %vm82, %v143, 0.0
    %145 = vadd.xlane.f32.xlu0 %v144
    %v146 = vpop.xlane.xlu0 %145
    %s147 = sld [smem:[#allocation2]]
    %v148 = vstv %s147
    %v149 = vadd.f32 %v146, %v148
    %v151 = vlaneseq
    %v152 = vand.u32 %v151, 127
    %v153 = vperm.slane %v149, %v152
    %vm155 = vcmask 57344
    %156 = vst.msk [vmem:[#allocation9] sm:$0x1] %vm155, %v153
    // Predicated region
    $region42: #{tpu_custom_call.1} parent=1 // pred_check
      _
    $region43: #{tpu_custom_call.1} parent=1 // pred_check_branch
      %158 = sbr.rel (0) target = $region45
    $region44: #{tpu_custom_call.1} parent=1 // pred_region
      %160 = vsyncadd [#allocation5], 0
      %s162 = sshll.u32 [#allocation9], 4
      %s163 = int_to_ptr.vmem [resolvable:$true] %s162
      %s164 = sshll.u32 %s7, 4
      %s165 = int_to_ptr.hbm [resolvable:$true] %s164
      %167 = dma.vmem_to_hbm [thread:$0]  %s163, 16, %s165, [#allocation5]
    $region45: #{tpu_custom_call.1} parent=1 // pred_fallthru
      _
    // Predicated region
    $region46: #{tpu_custom_call.1} parent=1 // pred_check
      _
    $region47: #{tpu_custom_call.1} parent=1 // pred_check_branch
      %169 = sbr.rel (0) target = $region49
    $region48: #{tpu_custom_call.1} parent=1 // pred_region
      %171 = dma.done [#allocation5], 16
    $region49: #{tpu_custom_call.1} parent=1 // pred_fallthru
      _
    %172 = vsyncpa [#allocation4], 1
    %173 = vsyncpa [#allocation7], 1
    %174 = vsyncpa [#allocation5], 1

</llo_original>
